<compile_context>
chip_gen: v7x
topology: tpu7x:2x2x1
jax: 0.10.0
libtpu: 0.0.40
codegen_flags: <defaults>
</compile_context>

<pallas_src>
import numpy as np
import jax
import jax.numpy as jnp
from jax.experimental import pallas as pl
from jax.experimental.pallas import tpu as pltpu

_SAFE_LOG_EPS = float(np.finfo(np.float64).eps)  # sonopy.safe_log clips at float eps
_TILE_F_MAX = 256                                 # frames per grid step


def _round_up(x, m):
    return ((x + m - 1) // m) * m


def _choose_tiling(num_frames):
    """Pick (tile_f, f_pad), tile_f a multiple of 16 (bf16 sublane packing).

    Short clips -> a single tile (no zero-frame waste beyond sublane rounding).
    Long clips  -> minimize padding over a few tile sizes (bounded waste <= 63
    frames instead of up to tile_f-1), tie-break on an even grid-step count
    (v7x: 2 TensorCores) and then on the larger tile (MXU M-row utilization,
    ~0.35us per-step overhead amortization).
    """
    f16 = _round_up(max(num_frames, 16), 16)
    if f16 <= _TILE_F_MAX:
        return f16, f16
    best_key, best = None, None
    for t in (256, 192, 128, 96, 64):
        f_pad = _round_up(num_frames, t)
        steps = f_pad // t
        key = (f_pad, steps % 2, -t)   # min padding, prefer even steps, larger tile
        if best_key is None or key < best_key:
            best_key, best = key, (t, f_pad)
    return best


def _filterbanks(sample_rate, num_filt, fft_len):
    """Triangle mel filterbank (best-effort reproduction of sonopy.filterbanks).
    # TODO(synk): validate triangle edges bit-for-bit against sonopy (top mel edge
    # uses hertz_to_mels(sample_rate), bin peaks truncated with astype(int64))."""
    def hertz_to_mels(f):
        return 1127.0 * np.log(1.0 + f / 700.0)

    def mel_to_hertz(mel):
        return 700.0 * (np.exp(mel / 1127.0) - 1.0)

    peaks_mel = np.linspace(hertz_to_mels(0.0), hertz_to_mels(sample_rate),
                            num_filt + 2, True)
    peaks_hz = mel_to_hertz(peaks_mel)
    peaks = (peaks_hz * fft_len / sample_rate).astype(np.int64)
    peaks = np.clip(peaks, 0, fft_len)

    banks = np.zeros((num_filt, fft_len), dtype=np.float64)
    for i in range(1, num_filt + 1):
        left, middle, right = peaks[i - 1], peaks[i], peaks[i + 1]
        if middle > left:
            banks[i - 1, left:middle] = np.linspace(0.0, 1.0, middle - left, False)
        if right > middle:
            banks[i - 1, middle:right] = np.linspace(1.0, 0.0, right - middle, False)
    return banks


def _dct2_ortho_matrix(n, num_coeffs):
    """Matrix M (n, num_coeffs) s.t. x @ M == scipy.fftpack.dct(x, norm='ortho')[:, :num_coeffs]."""
    k = np.arange(n)[None, :]          # output coeff index
    nn = np.arange(n)[:, None]         # input sample index
    mat = np.sqrt(2.0 / n) * np.cos(np.pi * k * (2 * nn + 1) / (2.0 * n))
    mat[:, 0] *= 1.0 / np.sqrt(2.0)
    return mat[:, :num_coeffs]


def _dft_matrices(window_size, fft_size):
    """Real-DFT basis: real = frames @ cos, imag-magnitude = frames @ sin."""
    n_bins = fft_size // 2 + 1
    w = np.arange(window_size)[:, None]
    b = np.arange(n_bins)[None, :]
    ang = 2.0 * np.pi * w * b / fft_size
    cos_m = np.cos(ang)
    sin_m = np.sin(ang)
    if window_size > fft_size:          # np.fft.rfft(n=fft_size) truncates
        cos_m[fft_size:, :] = 0.0
        sin_m[fft_size:, :] = 0.0
    return cos_m, sin_m


def _make_mfcc_kernel(b_pad):
    eps = np.float32(_SAFE_LOG_EPS)

    def kernel(frames_ref, cossin_ref, filt_ref, dct_ref, out_ref):
        frames = frames_ref[...]                          # (TILE_F, W) bf16
        # cos / sin halves; b_pad % 128 == 0 -> lane-aligned slices, no relayout.
        # Two N=b_pad matmuls + square-accumulate: halves the live f32 intermediate
        # vs one wide 2*b_pad matmul and overlaps the VPU squares with MXU pushes.
        re = jnp.dot(frames, cossin_ref[:, :b_pad],
                     preferred_element_type=jnp.float32)
        powers = re * re
        im = jnp.dot(frames, cossin_ref[:, b_pad:],
                     preferred_element_type=jnp.float32)
        powers = powers + im * im                         # (TILE_F, B_PAD) power spectrum
        # (1/fft_size power-spec scale is folded into the bf16 cos/sin constants.)

        # filt_ref: (B_PAD, 128) = [filterbank.T | ones (energy col) | zero pad]
        # -> lane-dense, unmasked matmul; padded cols give log(eps), killed by the
        #    zero rows of dct_ref below.
        mels = jnp.log(jnp.maximum(
            jnp.dot(powers, filt_ref[...], preferred_element_type=jnp.float32), eps))

        # dct_ref: (128, C_PAD); col0 routes the log-energy, cols 1..num_coeffs-1
        # are the DCT, the rest zero (lane padding) -> unmasked lane-dense store.
        out_ref[...] = jnp.dot(mels, dct_ref[...],
                               preferred_element_type=jnp.float32)

    return kernel


class MFCCPallas:
    def __init__(self, sample_rate, fft_size=400, window_stride=(400, 200),
                 num_filt=40, num_coeffs=40):
        self.sample_rate = sample_rate
        self.fft_size = fft_size
        self.window_size, self.hop_size = window_stride
        self.num_filt = num_filt
        self.num_coeffs = num_coeffs

        n_bins = fft_size // 2 + 1
        self.n_bins = n_bins
        self.b_pad = _round_up(n_bins, 128)                 # lane-dense DFT output
        self.c_pad = _round_up(max(num_coeffs, 128), 128)   # lane-dense kernel output
        self.k_pad = _round_up(num_filt + 1, 128)           # filt(+energy) contraction dim

        cos_m, sin_m = _dft_matrices(self.window_size, fft_size)
        scale = 1.0 / np.sqrt(fft_size)                     # fold power-spec 1/N scale
        cossin = np.zeros((self.window_size, 2 * self.b_pad), dtype=np.float64)
        cossin[:, :n_bins] = cos_m * scale
        cossin[:, self.b_pad:self.b_pad + n_bins] = sin_m * scale

        filt = _filterbanks(sample_rate, num_filt, n_bins)  # (num_filt, n_bins)
        filt_aug = np.zeros((self.b_pad, self.k_pad), dtype=np.float64)
        filt_aug[:n_bins, :num_filt] = filt.T
        filt_aug[:n_bins, num_filt] = 1.0                   # energy (sum of powers) column

        dct_m = _dct2_ortho_matrix(num_filt, num_coeffs)    # (num_filt, num_coeffs)
        dct_aug = np.zeros((self.k_pad, self.c_pad), dtype=np.float64)
        dct_aug[:num_filt, :num_coeffs] = dct_m
        dct_aug[:num_filt, 0] = 0.0                         # coeff 0 replaced by energy
        dct_aug[num_filt, 0] = 1.0                          # route log-energy to col 0

        # bf16 operands for the dominant DFT matmul (native MXU path, half HBM/VMEM);
        # the tiny filterbank / DCT matmuls stay f32 for accuracy at negligible cost.
        self.cossin = jnp.asarray(cossin, jnp.bfloat16)
        self.filt_aug = jnp.asarray(filt_aug, jnp.float32)
        self.dct_aug = jnp.asarray(dct_aug, jnp.float32)
        self._kernel = _make_mfcc_kernel(self.b_pad)

        # jax.jit caches per audio length; bucket/pad clip lengths upstream (and batch
        # short clips along the frame axis) to avoid recompiles / tiny-M MXU calls.
        self._forward = jax.jit(self._forward_impl)

    # ---- framing (wrapper glue, traced under jit) -------------------------------
    def _frame(self, audio, num_frames):
        w, h = self.window_size, self.hop_size
        if w % h == 0:
            # reshape+concat framing: frame i = concat(chunks[i], ..., chunks[i+r-1])
            ratio = w // h
            n_chunks = num_frames + ratio - 1
            chunks = audio[:n_chunks * h].reshape(n_chunks, h)
            return jnp.concatenate(
                [chunks[r:r + num_frames] for r in range(ratio)], axis=1)
        # fallback: gather framing (int32 indices)
        idx = (np.arange(num_frames, dtype=np.int32)[:, None] * h
               + np.arange(w, dtype=np.int32)[None, :])
        return audio[idx]

    # ---- jitted forward ---------------------------------------------------------
    def _forward_impl(self, audio):
        w, h = self.window_size, self.hop_size
        n = audio.shape[0]
        num_frames = (n - w) // h + 1

        # Cast BEFORE framing so the duplicated frames array (the kernel's largest
        # HBM read) is bf16 -> half the traffic of f32 framing.
        # TODO(synk): stream non-duplicated (n_chunks, hop) chunks into the kernel
        # (manual pl.ANY + make_async_copy of two half-window views) to remove the
        # 2x overlap entirely on HBM-bound generations.
        frames = self._frame(audio.astype(jnp.bfloat16), num_frames)   # (F, W) bf16

        tile_f, f_pad = _choose_tiling(num_frames)
        if f_pad > num_frames:
            frames = jnp.pad(frames, ((0, f_pad - num_frames), (0, 0)))

        flops = f_pad * (2 * 2 * w * self.b_pad            # cos + sin DFT matmuls
                         + 2 * self.b_pad * self.k_pad     # filterbank matmul
                         + 2 * self.k_pad * self.c_pad)    # DCT matmul
        bytes_accessed = (2 * (f_pad * w + w * 2 * self.b_pad)          # bf16
                          + 4 * (f_pad * self.c_pad
                                 + self.b_pad * self.k_pad
                                 + self.k_pad * self.c_pad))            # f32

        out_padded = pl.pallas_call(
            self._kernel,
            out_shape=jax.ShapeDtypeStruct((f_pad, self.c_pad), jnp.float32),
            grid_spec=pltpu.PrefetchScalarGridSpec(
                num_scalar_prefetch=0,
                grid=(f_pad // tile_f,),
                in_specs=[
                    pl.BlockSpec((tile_f, w), lambda i: (i, 0)),
                    # constant matrices: same block every step -> stay VMEM-resident
                    pl.BlockSpec((w, 2 * self.b_pad), lambda i: (0, 0)),
                    pl.BlockSpec((self.b_pad, self.k_pad), lambda i: (0, 0)),
                    pl.BlockSpec((self.k_pad, self.c_pad), lambda i: (0, 0)),
                ],
                out_specs=pl.BlockSpec((tile_f, self.c_pad), lambda i: (i, 0)),
            ),
            compiler_params=pltpu.CompilerParams(
                dimension_semantics=("parallel",),   # shard frame tiles across TCs (v7x)
            ),
            cost_estimate=pl.CostEstimate(
                flops=flops,
                transcendentals=f_pad * self.k_pad,
                bytes_accessed=bytes_accessed,
            ),
        )(frames, self.cossin, self.filt_aug, self.dct_aug)

        mfccs = out_padded[:num_frames, :self.num_coeffs]    # drop frame/coeff padding
        # torch: Tensor(mfccs).transpose(0, 1).unsqueeze(0) -> (1, num_coeffs, num_frames)
        return jnp.transpose(mfccs, (1, 0))[None, :, :]

    def __call__(self, x):
        # x: (1, N) float32 audio  (mirrors x.squeeze(0) in the torch module)
        audio = jnp.asarray(x, jnp.float32).reshape(-1)
        return self._forward(audio)


if __name__ == "__main__":
    sample_rate = 8000
    n_samples = 2000                      # small audio: 9 frames at (400, 200)
    key = jax.random.PRNGKey(0)
    x = jax.random.normal(key, (1, n_samples), dtype=jnp.float32)

    mfcc = MFCCPallas(sample_rate)        # fft_size=400, stride=(400,200), 40 filt/coeffs
    out = mfcc(x)
    out = jax.block_until_ready(out)

    expected_frames = (n_samples - 400) // 200 + 1
    assert out.shape == (1, 40, expected_frames), out.shape
    assert out.dtype == jnp.float32
    assert bool(jnp.all(jnp.isfinite(out)))
    print("KERNEL_OK")
</pallas_src>

<mosaic_0001>
module attributes {stable_mosaic.version = 11 : i64} {
  func.func @kernel(%arg0: i32, %arg1: memref<16x400xbf16, #tpu.memory_space<vmem>>, %arg2: memref<400x512xbf16, #tpu.memory_space<vmem>>, %arg3: memref<256x128xf32, #tpu.memory_space<vmem>>, %arg4: memref<128x128xf32, #tpu.memory_space<vmem>>, %arg5: memref<16x128xf32, #tpu.memory_space<vmem>>) attributes {dimension_semantics = [#tpu.dimension_semantics<parallel>], iteration_bounds = array<i64: 1>, scalar_prefetch = 0 : i64, scratch_operands = 0 : i64, tpu.core_type = #tpu.core_type<tc>, window_params = [{transform_indices = @transform_0, window_bounds = array<i64: 16, 400>}, {pipeline_mode = #tpu.pipeline_mode<synchronous>, transform_indices = @transform_1, window_bounds = array<i64: 400, 512>}, {pipeline_mode = #tpu.pipeline_mode<synchronous>, transform_indices = @transform_2, window_bounds = array<i64: 256, 128>}, {pipeline_mode = #tpu.pipeline_mode<synchronous>, transform_indices = @transform_3, window_bounds = array<i64: 128, 128>}, {transform_indices = @transform_4, window_bounds = array<i64: 16, 128>}]} {
    %c0 = arith.constant 0 : index
    %c0_0 = arith.constant 0 : index
    %0 = vector.load %arg1[%c0, %c0_0] : memref<16x400xbf16, #tpu.memory_space<vmem>>, vector<16x400xbf16>
    %c0_1 = arith.constant 0 : index
    %c0_2 = arith.constant 0 : index
    %1 = vector.load %arg2[%c0_1, %c0_2] : memref<400x512xbf16, #tpu.memory_space<vmem>>, vector<400x256xbf16>
    %cst = arith.constant dense<0.000000e+00> : vector<16x256xf32>
    %2 = tpu.matmul %0, %1, %cst {dimension_numbers = #tpu.dot_dimension_numbers<[1], [0], [0], [1], [0, 0, 1, 1], [], []>} : vector<16x400xbf16>, vector<400x256xbf16>, vector<16x256xf32> -> vector<16x256xf32>
    %3 = arith.mulf %2, %2 : vector<16x256xf32>
    %c0_3 = arith.constant 0 : index
    %c256 = arith.constant 256 : index
    %4 = vector.load %arg2[%c0_3, %c256] : memref<400x512xbf16, #tpu.memory_space<vmem>>, vector<400x256xbf16>
    %cst_4 = arith.constant dense<0.000000e+00> : vector<16x256xf32>
    %5 = tpu.matmul %0, %4, %cst_4 {dimension_numbers = #tpu.dot_dimension_numbers<[1], [0], [0], [1], [0, 0, 1, 1], [], []>} : vector<16x400xbf16>, vector<400x256xbf16>, vector<16x256xf32> -> vector<16x256xf32>
    %6 = arith.mulf %5, %5 : vector<16x256xf32>
    %7 = arith.addf %3, %6 : vector<16x256xf32>
    %c0_5 = arith.constant 0 : index
    %c0_6 = arith.constant 0 : index
    %8 = vector.load %arg3[%c0_5, %c0_6] : memref<256x128xf32, #tpu.memory_space<vmem>>, vector<256x128xf32>
    %cst_7 = arith.constant dense<0.000000e+00> : vector<16x128xf32>
    %9 = tpu.matmul %7, %8, %cst_7 {dimension_numbers = #tpu.dot_dimension_numbers<[1], [0], [0], [1], [0, 0, 1, 1], [], []>} : vector<16x256xf32>, vector<256x128xf32>, vector<16x128xf32> -> vector<16x128xf32>
    %cst_8 = arith.constant 2.22044605E-16 : f32
    %10 = vector.broadcast %cst_8 : f32 to vector<16x128xf32>
    %11 = arith.maximumf %9, %10 : vector<16x128xf32>
    %12 = math.log %11 : vector<16x128xf32>
    %c0_9 = arith.constant 0 : index
    %c0_10 = arith.constant 0 : index
    %13 = vector.load %arg4[%c0_9, %c0_10] : memref<128x128xf32, #tpu.memory_space<vmem>>, vector<128x128xf32>
    %cst_11 = arith.constant dense<0.000000e+00> : vector<16x128xf32>
    %14 = tpu.matmul %12, %13, %cst_11 {dimension_numbers = #tpu.dot_dimension_numbers<[1], [0], [0], [1], [0, 0, 1, 1], [], []>} : vector<16x128xf32>, vector<128x128xf32>, vector<16x128xf32> -> vector<16x128xf32>
    %c0_12 = arith.constant 0 : index
    %c0_13 = arith.constant 0 : index
    %15 = vector.load %arg5[%c0_12, %c0_13] : memref<16x128xf32, #tpu.memory_space<vmem>>, vector<16x128xf32>
    tpu.vector_store %arg5[%c0_12, %c0_13], %14 {strides = array<i32>} : memref<16x128xf32, #tpu.memory_space<vmem>>, vector<16x128xf32>,
    return
  }
  func.func @transform_0(%arg0: i32) -> (i32, i32) {
    %c0_i32 = arith.constant 0 : i32
    %c0_i32_0 = arith.constant 0 : i32
    return %arg0, %c0_i32 : i32, i32
  }
  func.func @transform_1(%arg0: i32) -> (i32, i32) {
    %c0_i32 = arith.constant 0 : i32
    %c0_i32_0 = arith.constant 0 : i32
    %c0_i32_1 = arith.constant 0 : i32
    return %c0_i32, %c0_i32_0 : i32, i32
  }
  func.func @transform_2(%arg0: i32) -> (i32, i32) {
    %c0_i32 = arith.constant 0 : i32
    %c0_i32_0 = arith.constant 0 : i32
    %c0_i32_1 = arith.constant 0 : i32
    return %c0_i32, %c0_i32_0 : i32, i32
  }
  func.func @transform_3(%arg0: i32) -> (i32, i32) {
    %c0_i32 = arith.constant 0 : i32
    %c0_i32_0 = arith.constant 0 : i32
    %c0_i32_1 = arith.constant 0 : i32
    return %c0_i32, %c0_i32_0 : i32, i32
  }
  func.func @transform_4(%arg0: i32) -> (i32, i32) {
    %c0_i32 = arith.constant 0 : i32
    %c0_i32_0 = arith.constant 0 : i32
    return %arg0, %c0_i32 : i32, i32
  }
}

</mosaic_0001>

<llo_original>
// kernel: _forward_impl.1
$region0: #{_forward_impl.1}
  #allocation0 [shape = 'u32[]', space=smem, size = 0x4, offset = 0x4, fixed_abs, tag = 'smem constant byte address 0x4 - core index']
  #allocation1 [shape = 'u32[144,128]{1,0:T(1,128)}', space=vmem, size = 0x12000, scoped, tag = 'internal scratch']
  %s0 = inlined_call_operand.vmem [shape: bf16[16,400], index: 0, kind: input, shape index: {}]
  %s1 = inlined_call_operand.vmem [shape: bf16[400,512], index: 1, kind: input, shape index: {}]
  %s2 = inlined_call_operand.vmem [shape: f32[256,128], index: 2, kind: input, shape index: {}]
  %s3 = inlined_call_operand.vmem [shape: f32[128,128], index: 3, kind: input, shape index: {}]
  %s4 = inlined_call_operand.vmem [shape: f32[16,128], index: 4, kind: output, shape index: {}]
  %s5 = sld [smem:[#allocation0]]
  $region26: #{_forward_impl.1} parent=0
    _
  %s7 = ssub.s32 1, %s5
  %s8 = scalar_select 0, %s7, %s5
  // Predicated region
  $region2: #{_forward_impl.1} parent=0 // pred_check
    _
  $region3: #{_forward_impl.1} parent=0 // pred_check_branch
    %10 = sbr.rel (0) target = $region5
  $region4: #{_forward_impl.1} parent=0 // pred_region
    _
  $region5: #{_forward_impl.1} parent=0 // pred_fallthru
    _
  // Predicated region
  $region6: #{_forward_impl.1} parent=0 // pred_check
    _
  $region7: #{_forward_impl.1} parent=0 // pred_check_branch
    %12 = sbr.rel (0) target = $region9
  $region8: #{_forward_impl.1} parent=0 // pred_region
    _
  $region9: #{_forward_impl.1} parent=0 // pred_fallthru
    _
  // Predicated region
  $region10: #{_forward_impl.1} parent=0 // pred_check
    _
  $region11: #{_forward_impl.1} parent=0 // pred_check_branch
    %14 = sbr.rel (0) target = $region13
  $region12: #{_forward_impl.1} parent=0 // pred_region
    _
  $region13: #{_forward_impl.1} parent=0 // pred_fallthru
    _
  // Predicated region
  $region14: #{_forward_impl.1} parent=0 // pred_check
    _
  $region15: #{_forward_impl.1} parent=0 // pred_check_branch
    %16 = sbr.rel (0) target = $region17
  $region16: #{_forward_impl.1} parent=0 // pred_region
    _
  $region17: #{_forward_impl.1} parent=0 // pred_fallthru
    _
  %v18 = vld [vmem:[%s0] sm:$0xff]
  %v19 = vld [vmem:[%s0 + $0x8] sm:$0xff]
  %v20 = vld [vmem:[%s0 + $0x10] sm:$0xff]
  %v21 = vld [vmem:[%s0 + $0x18] sm:$0xff]
  %v22 = vld [vmem:[%s1] sm:$0xff]
  %v23 = vld [vmem:[%s1 + $0x10] sm:$0xff]
  %v24 = vld [vmem:[%s1 + $0x20] sm:$0xff]
  %v25 = vld [vmem:[%s1 + $0x30] sm:$0xff]
  %v26 = vld [vmem:[%s1 + $0x40] sm:$0xff]
  %v27 = vld [vmem:[%s1 + $0x50] sm:$0xff]
  %v28 = vld [vmem:[%s1 + $0x60] sm:$0xff]
  %v29 = vld [vmem:[%s1 + $0x70] sm:$0xff]
  %v30 = vld [vmem:[%s1 + $0x80] sm:$0xff]
  %v31 = vld [vmem:[%s1 + $0x90] sm:$0xff]
  %v32 = vld [vmem:[%s1 + $0xa0] sm:$0xff]
  %v33 = vld [vmem:[%s1 + $0xb0] sm:$0xff]
  %v34 = vld [vmem:[%s1 + $0xc0] sm:$0xff]
  %v35 = vld [vmem:[%s1 + $0xd0] sm:$0xff]
  %v36 = vld [vmem:[%s1 + $0xe0] sm:$0xff]
  %v37 = vld [vmem:[%s1 + $0xf0] sm:$0xff]
  %v38 = vld [vmem:[%s1 + $0x100] sm:$0xff]
  %v39 = vld [vmem:[%s1 + $0x110] sm:$0xff]
  %v40 = vld [vmem:[%s1 + $0x120] sm:$0xff]
  %v41 = vld [vmem:[%s1 + $0x130] sm:$0xff]
  %v42 = vld [vmem:[%s1 + $0x140] sm:$0xff]
  %v43 = vld [vmem:[%s1 + $0x150] sm:$0xff]
  %v44 = vld [vmem:[%s1 + $0x160] sm:$0xff]
  %v45 = vld [vmem:[%s1 + $0x170] sm:$0xff]
  %v46 = vld [vmem:[%s1 + $0x180] sm:$0xff]
  %v47 = vld [vmem:[%s1 + $0x190] sm:$0xff]
  %v48 = vld [vmem:[%s1 + $0x1a0] sm:$0xff]
  %v49 = vld [vmem:[%s1 + $0x1b0] sm:$0xff]
  %v50 = vld [vmem:[%s1 + $0x1c0] sm:$0xff]
  %v51 = vld [vmem:[%s1 + $0x1d0] sm:$0xff]
  %v52 = vld [vmem:[%s1 + $0x1e0] sm:$0xff]
  %v53 = vld [vmem:[%s1 + $0x1f0] sm:$0xff]
  %v54 = vld [vmem:[%s1 + $0x200] sm:$0xff]
  %v55 = vld [vmem:[%s1 + $0x210] sm:$0xff]
  %v56 = vld [vmem:[%s1 + $0x220] sm:$0xff]
  %v57 = vld [vmem:[%s1 + $0x230] sm:$0xff]
  %v58 = vld [vmem:[%s1 + $0x240] sm:$0xff]
  %v59 = vld [vmem:[%s1 + $0x250] sm:$0xff]
  %v60 = vld [vmem:[%s1 + $0x260] sm:$0xff]
  %v61 = vld [vmem:[%s1 + $0x270] sm:$0xff]
  %v62 = vld [vmem:[%s1 + $0x280] sm:$0xff]
  %v63 = vld [vmem:[%s1 + $0x290] sm:$0xff]
  %v64 = vld [vmem:[%s1 + $0x2a0] sm:$0xff]
  %v65 = vld [vmem:[%s1 + $0x2b0] sm:$0xff]
  %v66 = vld [vmem:[%s1 + $0x2c0] sm:$0xff]
  %v67 = vld [vmem:[%s1 + $0x2d0] sm:$0xff]
  %v68 = vld [vmem:[%s1 + $0x2e0] sm:$0xff]
  %v69 = vld [vmem:[%s1 + $0x2f0] sm:$0xff]
  %v70 = vld [vmem:[%s1 + $0x300] sm:$0xff]
  %v71 = vld [vmem:[%s1 + $0x310] sm:$0xff]
  %v76 = vunpack.c.l.b16 %v18
  %v77 = vunpack.c.h.b16 %v18
  %v78 = vunpack.c.l.b16 %v19
  %v79 = vunpack.c.h.b16 %v19
  %v80 = vunpack.c.l.b16 %v20
  %v81 = vunpack.c.h.b16 %v20
  %v82 = vunpack.c.l.b16 %v21
  %v83 = vunpack.c.h.b16 %v21
  %v84 = vpack.c.b16 %v80, %v76
  %v85 = vpack.c.b16 %v81, %v77
  %v86 = vpack.c.b16 %v82, %v78
  %v87 = vpack.c.b16 %v83, %v79
  %v141 = vunpack.c.l.b16 %v22
  %v142 = vunpack.c.h.b16 %v22
  %v143 = vunpack.c.l.b16 %v23
  %v144 = vunpack.c.h.b16 %v23
  %v145 = vunpack.c.l.b16 %v24
  %v146 = vunpack.c.h.b16 %v24
  %v147 = vunpack.c.l.b16 %v25
  %v148 = vunpack.c.h.b16 %v25
  %v149 = vunpack.c.l.b16 %v26
  %v150 = vunpack.c.h.b16 %v26
  %v151 = vunpack.c.l.b16 %v27
  %v152 = vunpack.c.h.b16 %v27
  %v153 = vunpack.c.l.b16 %v28
  %v154 = vunpack.c.h.b16 %v28
  %v155 = vunpack.c.l.b16 %v29
  %v156 = vunpack.c.h.b16 %v29
  %v157 = vunpack.c.l.b16 %v30
  %v158 = vunpack.c.h.b16 %v30
  %v159 = vunpack.c.l.b16 %v31
  %v160 = vunpack.c.h.b16 %v31
  %v161 = vunpack.c.l.b16 %v32
  %v162 = vunpack.c.h.b16 %v32
  %v163 = vunpack.c.l.b16 %v33
  %v164 = vunpack.c.h.b16 %v33
  %v165 = vunpack.c.l.b16 %v34
  %v166 = vunpack.c.h.b16 %v34
  %v167 = vunpack.c.l.b16 %v35
  %v168 = vunpack.c.h.b16 %v35
  %v169 = vunpack.c.l.b16 %v36
  %v170 = vunpack.c.h.b16 %v36
  %v171 = vunpack.c.l.b16 %v37
  %v172 = vunpack.c.h.b16 %v37
  %v173 = vunpack.c.l.b16 %v38
  %v174 = vunpack.c.h.b16 %v38
  %v175 = vunpack.c.l.b16 %v39
  %v176 = vunpack.c.h.b16 %v39
  %v177 = vunpack.c.l.b16 %v40
  %v178 = vunpack.c.h.b16 %v40
  %v179 = vunpack.c.l.b16 %v41
  %v180 = vunpack.c.h.b16 %v41
  %v181 = vunpack.c.l.b16 %v42
  %v182 = vunpack.c.h.b16 %v42
  %v183 = vunpack.c.l.b16 %v43
  %v184 = vunpack.c.h.b16 %v43
  %v185 = vunpack.c.l.b16 %v44
  %v186 = vunpack.c.h.b16 %v44
  %v187 = vunpack.c.l.b16 %v45
  %v188 = vunpack.c.h.b16 %v45
  %v189 = vunpack.c.l.b16 %v46
  %v190 = vunpack.c.h.b16 %v46
  %v191 = vunpack.c.l.b16 %v47
  %v192 = vunpack.c.h.b16 %v47
  %v193 = vunpack.c.l.b16 %v48
  %v194 = vunpack.c.h.b16 %v48
  %v195 = vunpack.c.l.b16 %v49
  %v196 = vunpack.c.h.b16 %v49
  %v197 = vunpack.c.l.b16 %v50
  %v198 = vunpack.c.h.b16 %v50
  %v199 = vunpack.c.l.b16 %v51
  %v200 = vunpack.c.h.b16 %v51
  %v201 = vunpack.c.l.b16 %v52
  %v202 = vunpack.c.h.b16 %v52
  %v203 = vunpack.c.l.b16 %v53
  %v204 = vunpack.c.h.b16 %v53
  %v205 = vunpack.c.l.b16 %v54
  %v206 = vunpack.c.h.b16 %v54
  %v207 = vunpack.c.l.b16 %v55
  %v208 = vunpack.c.h.b16 %v55
  %v209 = vunpack.c.l.b16 %v56
  %v210 = vunpack.c.h.b16 %v56
  %v211 = vunpack.c.l.b16 %v57
  %v212 = vunpack.c.h.b16 %v57
  %v213 = vunpack.c.l.b16 %v58
  %v214 = vunpack.c.h.b16 %v58
  %v215 = vunpack.c.l.b16 %v59
  %v216 = vunpack.c.h.b16 %v59
  %v217 = vunpack.c.l.b16 %v60
  %v218 = vunpack.c.h.b16 %v60
  %v219 = vunpack.c.l.b16 %v61
  %v220 = vunpack.c.h.b16 %v61
  %v221 = vunpack.c.l.b16 %v62
  %v222 = vunpack.c.h.b16 %v62
  %v223 = vunpack.c.l.b16 %v63
  %v224 = vunpack.c.h.b16 %v63
  %v225 = vunpack.c.l.b16 %v64
  %v226 = vunpack.c.h.b16 %v64
  %v227 = vunpack.c.l.b16 %v65
  %v228 = vunpack.c.h.b16 %v65
  %v229 = vunpack.c.l.b16 %v66
  %v230 = vunpack.c.h.b16 %v66
  %v231 = vunpack.c.l.b16 %v67
  %v232 = vunpack.c.h.b16 %v67
  %v233 = vunpack.c.l.b16 %v68
  %v234 = vunpack.c.h.b16 %v68
  %v235 = vunpack.c.l.b16 %v69
  %v236 = vunpack.c.h.b16 %v69
  %v237 = vunpack.c.l.b16 %v70
  %v238 = vunpack.c.h.b16 %v70
  %v239 = vunpack.c.l.b16 %v71
  %v240 = vunpack.c.h.b16 %v71
  %v241 = vpack.c.b16 %v143, %v141
  %v242 = vpack.c.b16 %v144, %v142
  %v243 = vpack.c.b16 %v147, %v145
  %v244 = vpack.c.b16 %v148, %v146
  %v245 = vpack.c.b16 %v151, %v149
  %v246 = vpack.c.b16 %v152, %v150
  %v247 = vpack.c.b16 %v155, %v153
  %v248 = vpack.c.b16 %v156, %v154
  %v249 = vpack.c.b16 %v159, %v157
  %v250 = vpack.c.b16 %v160, %v158
  %v251 = vpack.c.b16 %v163, %v161
  %v252 = vpack.c.b16 %v164, %v162
  %v253 = vpack.c.b16 %v167, %v165
  %v254 = vpack.c.b16 %v168, %v166
  %v255 = vpack.c.b16 %v171, %v169
  %v256 = vpack.c.b16 %v172, %v170
  %v257 = vpack.c.b16 %v175, %v173
  %v258 = vpack.c.b16 %v176, %v174
  %v259 = vpack.c.b16 %v179, %v177
  %v260 = vpack.c.b16 %v180, %v178
  %v261 = vpack.c.b16 %v183, %v181
  %v262 = vpack.c.b16 %v184, %v182
  %v263 = vpack.c.b16 %v187, %v185
  %v264 = vpack.c.b16 %v188, %v186
  %v265 = vpack.c.b16 %v191, %v189
  %v266 = vpack.c.b16 %v192, %v190
  %v267 = vpack.c.b16 %v195, %v193
  %v268 = vpack.c.b16 %v196, %v194
  %v269 = vpack.c.b16 %v199, %v197
  %v270 = vpack.c.b16 %v200, %v198
  %v271 = vpack.c.b16 %v203, %v201
  %v272 = vpack.c.b16 %v204, %v202
  %v273 = vpack.c.b16 %v207, %v205
  %v274 = vpack.c.b16 %v208, %v206
  %v275 = vpack.c.b16 %v211, %v209
  %v276 = vpack.c.b16 %v212, %v210
  %v277 = vpack.c.b16 %v215, %v213
  %v278 = vpack.c.b16 %v216, %v214
  %v279 = vpack.c.b16 %v219, %v217
  %v280 = vpack.c.b16 %v220, %v218
  %v281 = vpack.c.b16 %v223, %v221
  %v282 = vpack.c.b16 %v224, %v222
  %v283 = vpack.c.b16 %v227, %v225
  %v284 = vpack.c.b16 %v228, %v226
  %v285 = vpack.c.b16 %v231, %v229
  %v286 = vpack.c.b16 %v232, %v230
  %v287 = vpack.c.b16 %v235, %v233
  %v288 = vpack.c.b16 %v236, %v234
  %v289 = vpack.c.b16 %v239, %v237
  %v290 = vpack.c.b16 %v240, %v238
  %vm341 = vcmask 130048
  %v343 = vsel %vm341, %v87, 0
  %345 = vmatprep.subr.bf16.mxu0 %v242
  %346 = vmatpush1.bf16.msra.mxu0 %v241
  %347 = vmatprep.subr.bf16.mxu0 %v244
  %348 = vmatpush1.bf16.msra.mxu0 %v243
  %349 = vmatprep.subr.bf16.mxu0 %v246
  %350 = vmatpush1.bf16.msra.mxu0 %v245
  %351 = vmatprep.subr.bf16.mxu0 %v248
  %352 = vmatpush1.bf16.msra.mxu0 %v247
  %353 = vmatprep.subr.bf16.mxu0 %v250
  %354 = vmatpush1.bf16.msra.mxu0 %v249
  %355 = vmatprep.subr.bf16.mxu0 %v252
  %356 = vmatpush1.bf16.msra.mxu0 %v251
  %357 = vmatprep.subr.bf16.mxu0 %v254
  %358 = vmatpush1.bf16.msra.mxu0 %v253
  %359 = vmatprep.subr.bf16.mxu0 %v256
  %360 = vmatpush1.bf16.msra.mxu0 %v255
  %361 = vmatprep.subr.bf16.mxu0 %v258
  %362 = vmatpush1.bf16.msra.mxu0 %v257
  %363 = vmatprep.subr.bf16.mxu0 %v260
  %364 = vmatpush1.bf16.msra.mxu0 %v259
  %365 = vmatprep.subr.bf16.mxu0 %v262
  %366 = vmatpush1.bf16.msra.mxu0 %v261
  %367 = vmatprep.subr.bf16.mxu0 %v264
  %368 = vmatpush1.bf16.msra.mxu0 %v263
  %369 = vmatprep.subr.bf16.mxu0 %v266
  %370 = vmatpush1.bf16.msra.mxu0 %v265
  %371 = vmatprep.subr.bf16.mxu0 %v268
  %372 = vmatpush1.bf16.msra.mxu0 %v267
  %373 = vmatprep.subr.bf16.mxu0 %v270
  %374 = vmatpush1.bf16.msra.mxu0 %v269
  %375 = vmatprep.subr.bf16.mxu0 %v272
  %376 = vmatpush1.bf16.msra.mxu0 %v271
  %377 = vmatprep.mubr.bf16.mxu0 %v85
  %378 = vmatmul.mubr.bf16.gmra.mrb[0].mxu0 %v84
  %v379 = vpop.f32.mrb[0].mxu0
  %v380 = vadd.f32 0.0, %v379
  %v381 = vpop.f32.mrb[0].mxu0
  %v382 = vadd.f32 0.0, %v381
  %v383 = vpop.f32.mrb[0].mxu0
  %v384 = vadd.f32 0.0, %v383
  %v385 = vpop.f32.mrb[0].mxu0
  %v386 = vadd.f32 0.0, %v385
  %387 = vdwg.mxu0
  %388 = vmatprep.subr.bf16.mxu0 %v274
  %389 = vmatpush1.bf16.msra.mxu0 %v273
  %390 = vmatprep.subr.bf16.mxu0 %v276
  %391 = vmatpush1.bf16.msra.mxu0 %v275
  %392 = vmatprep.subr.bf16.mxu0 %v278
  %393 = vmatpush1.bf16.msra.mxu0 %v277
  %394 = vmatprep.subr.bf16.mxu0 %v280
  %395 = vmatpush1.bf16.msra.mxu0 %v279
  %396 = vmatprep.subr.bf16.mxu0 %v282
  %397 = vmatpush1.bf16.msra.mxu0 %v281
  %398 = vmatprep.subr.bf16.mxu0 %v284
  %399 = vmatpush1.bf16.msra.mxu0 %v283
  %400 = vmatprep.subr.bf16.mxu0 %v286
  %401 = vmatpush1.bf16.msra.mxu0 %v285
  %402 = vmatprep.subr.bf16.mxu0 %v288
  %403 = vmatpush1.bf16.msra.mxu0 %v287
  %404 = vmatprep.subr.bf16.mxu0 %v290
  %405 = vmatpush1.bf16.msra.mxu0 %v289
  %406 = vmatprep.subr.bf16.mxu0 0
  %407 = vmatpush1.bf16.msra.mxu0 0
  %408 = vmatprep.subr.bf16.mxu0 0
  %409 = vmatpush1.bf16.msra.mxu0 0
  %410 = vmatprep.subr.bf16.mxu0 0
  %411 = vmatpush1.bf16.msra.mxu0 0
  %412 = vmatprep.subr.bf16.mxu0 0
  %413 = vmatpush1.bf16.msra.mxu0 0
  %414 = vmatprep.subr.bf16.mxu0 0
  %415 = vmatpush1.bf16.msra.mxu0 0
  %416 = vmatprep.subr.bf16.mxu0 0
  %417 = vmatpush1.bf16.msra.mxu0 0
  %418 = vmatprep.subr.bf16.mxu0 0
  %419 = vmatpush1.bf16.msra.mxu0 0
  %420 = vmatprep.mubr.bf16.mxu0 %v343
  %421 = vmatmul.mubr.bf16.gmra.mrb[0].mxu0 %v86
  %v422 = vpop.f32.mrb[0].mxu0
  %v423 = vadd.f32 %v380, %v422
  %v424 = vpop.f32.mrb[0].mxu0
  %v425 = vadd.f32 %v382, %v424
  %v426 = vpop.f32.mrb[0].mxu0
  %v427 = vadd.f32 %v384, %v426
  %v428 = vpop.f32.mrb[0].mxu0
  %v429 = vadd.f32 %v386, %v428
  %430 = vdwg.mxu0
  %v431 = vmul.f32 %v423, %v423
  %v432 = vmul.f32 %v425, %v425
  %v433 = vmul.f32 %v427, %v427
  %v434 = vmul.f32 %v429, %v429
  %v435 = vld [vmem:[%s1 + $0x8] sm:$0xff]
  %v436 = vld [vmem:[%s1 + $0x18] sm:$0xff]
  %v437 = vld [vmem:[%s1 + $0x28] sm:$0xff]
  %v438 = vld [vmem:[%s1 + $0x38] sm:$0xff]
  %v439 = vld [vmem:[%s1 + $0x48] sm:$0xff]
  %v440 = vld [vmem:[%s1 + $0x58] sm:$0xff]
  %v441 = vld [vmem:[%s1 + $0x68] sm:$0xff]
  %v442 = vld [vmem:[%s1 + $0x78] sm:$0xff]
  %v443 = vld [vmem:[%s1 + $0x88] sm:$0xff]
  %v444 = vld [vmem:[%s1 + $0x98] sm:$0xff]
  %v445 = vld [vmem:[%s1 + $0xa8] sm:$0xff]
  %v446 = vld [vmem:[%s1 + $0xb8] sm:$0xff]
  %v447 = vld [vmem:[%s1 + $0xc8] sm:$0xff]
  %v448 = vld [vmem:[%s1 + $0xd8] sm:$0xff]
  %v449 = vld [vmem:[%s1 + $0xe8] sm:$0xff]
  %v450 = vld [vmem:[%s1 + $0xf8] sm:$0xff]
  %v451 = vld [vmem:[%s1 + $0x108] sm:$0xff]
  %v452 = vld [vmem:[%s1 + $0x118] sm:$0xff]
  %v453 = vld [vmem:[%s1 + $0x128] sm:$0xff]
  %v454 = vld [vmem:[%s1 + $0x138] sm:$0xff]
  %v455 = vld [vmem:[%s1 + $0x148] sm:$0xff]
  %v456 = vld [vmem:[%s1 + $0x158] sm:$0xff]
  %v457 = vld [vmem:[%s1 + $0x168] sm:$0xff]
  %v458 = vld [vmem:[%s1 + $0x178] sm:$0xff]
  %v459 = vld [vmem:[%s1 + $0x188] sm:$0xff]
  %v460 = vld [vmem:[%s1 + $0x198] sm:$0xff]
  %v461 = vld [vmem:[%s1 + $0x1a8] sm:$0xff]
  %v462 = vld [vmem:[%s1 + $0x1b8] sm:$0xff]
  %v463 = vld [vmem:[%s1 + $0x1c8] sm:$0xff]
  %v464 = vld [vmem:[%s1 + $0x1d8] sm:$0xff]
  %v465 = vld [vmem:[%s1 + $0x1e8] sm:$0xff]
  %v466 = vld [vmem:[%s1 + $0x1f8] sm:$0xff]
  %v467 = vld [vmem:[%s1 + $0x208] sm:$0xff]
  %v468 = vld [vmem:[%s1 + $0x218] sm:$0xff]
  %v469 = vld [vmem:[%s1 + $0x228] sm:$0xff]
  %v470 = vld [vmem:[%s1 + $0x238] sm:$0xff]
  %v471 = vld [vmem:[%s1 + $0x248] sm:$0xff]
  %v472 = vld [vmem:[%s1 + $0x258] sm:$0xff]
  %v473 = vld [vmem:[%s1 + $0x268] sm:$0xff]
  %v474 = vld [vmem:[%s1 + $0x278] sm:$0xff]
  %v475 = vld [vmem:[%s1 + $0x288] sm:$0xff]
  %v476 = vld [vmem:[%s1 + $0x298] sm:$0xff]
  %v477 = vld [vmem:[%s1 + $0x2a8] sm:$0xff]
  %v478 = vld [vmem:[%s1 + $0x2b8] sm:$0xff]
  %v479 = vld [vmem:[%s1 + $0x2c8] sm:$0xff]
  %v480 = vld [vmem:[%s1 + $0x2d8] sm:$0xff]
  %v481 = vld [vmem:[%s1 + $0x2e8] sm:$0xff]
  %v482 = vld [vmem:[%s1 + $0x2f8] sm:$0xff]
  %v483 = vld [vmem:[%s1 + $0x308] sm:$0xff]
  %v484 = vld [vmem:[%s1 + $0x318] sm:$0xff]
  %v535 = vunpack.c.l.b16 %v435
  %v536 = vunpack.c.h.b16 %v435
  %v537 = vunpack.c.l.b16 %v436
  %v538 = vunpack.c.h.b16 %v436
  %v539 = vunpack.c.l.b16 %v437
  %v540 = vunpack.c.h.b16 %v437
  %v541 = vunpack.c.l.b16 %v438
  %v542 = vunpack.c.h.b16 %v438
  %v543 = vunpack.c.l.b16 %v439
  %v544 = vunpack.c.h.b16 %v439
  %v545 = vunpack.c.l.b16 %v440
  %v546 = vunpack.c.h.b16 %v440
  %v547 = vunpack.c.l.b16 %v441
  %v548 = vunpack.c.h.b16 %v441
  %v549 = vunpack.c.l.b16 %v442
  %v550 = vunpack.c.h.b16 %v442
  %v551 = vunpack.c.l.b16 %v443
  %v552 = vunpack.c.h.b16 %v443
  %v553 = vunpack.c.l.b16 %v444
  %v554 = vunpack.c.h.b16 %v444
  %v555 = vunpack.c.l.b16 %v445
  %v556 = vunpack.c.h.b16 %v445
  %v557 = vunpack.c.l.b16 %v446
  %v558 = vunpack.c.h.b16 %v446
  %v559 = vunpack.c.l.b16 %v447
  %v560 = vunpack.c.h.b16 %v447
  %v561 = vunpack.c.l.b16 %v448
  %v562 = vunpack.c.h.b16 %v448
  %v563 = vunpack.c.l.b16 %v449
  %v564 = vunpack.c.h.b16 %v449
  %v565 = vunpack.c.l.b16 %v450
  %v566 = vunpack.c.h.b16 %v450
  %v567 = vunpack.c.l.b16 %v451
  %v568 = vunpack.c.h.b16 %v451
  %v569 = vunpack.c.l.b16 %v452
  %v570 = vunpack.c.h.b16 %v452
  %v571 = vunpack.c.l.b16 %v453
  %v572 = vunpack.c.h.b16 %v453
  %v573 = vunpack.c.l.b16 %v454
  %v574 = vunpack.c.h.b16 %v454
  %v575 = vunpack.c.l.b16 %v455
  %v576 = vunpack.c.h.b16 %v455
  %v577 = vunpack.c.l.b16 %v456
  %v578 = vunpack.c.h.b16 %v456
  %v579 = vunpack.c.l.b16 %v457
  %v580 = vunpack.c.h.b16 %v457
  %v581 = vunpack.c.l.b16 %v458
  %v582 = vunpack.c.h.b16 %v458
  %v583 = vunpack.c.l.b16 %v459
  %v584 = vunpack.c.h.b16 %v459
  %v585 = vunpack.c.l.b16 %v460
  %v586 = vunpack.c.h.b16 %v460
  %v587 = vunpack.c.l.b16 %v461
  %v588 = vunpack.c.h.b16 %v461
  %v589 = vunpack.c.l.b16 %v462
  %v590 = vunpack.c.h.b16 %v462
  %v591 = vunpack.c.l.b16 %v463
  %v592 = vunpack.c.h.b16 %v463
  %v593 = vunpack.c.l.b16 %v464
  %v594 = vunpack.c.h.b16 %v464
  %v595 = vunpack.c.l.b16 %v465
  %v596 = vunpack.c.h.b16 %v465
  %v597 = vunpack.c.l.b16 %v466
  %v598 = vunpack.c.h.b16 %v466
  %v599 = vunpack.c.l.b16 %v467
  %v600 = vunpack.c.h.b16 %v467
  %v601 = vunpack.c.l.b16 %v468
  %v602 = vunpack.c.h.b16 %v468
  %v603 = vunpack.c.l.b16 %v469
  %v604 = vunpack.c.h.b16 %v469
  %v605 = vunpack.c.l.b16 %v470
  %v606 = vunpack.c.h.b16 %v470
  %v607 = vunpack.c.l.b16 %v471
  %v608 = vunpack.c.h.b16 %v471
  %v609 = vunpack.c.l.b16 %v472
  %v610 = vunpack.c.h.b16 %v472
  %v611 = vunpack.c.l.b16 %v473
  %v612 = vunpack.c.h.b16 %v473
  %v613 = vunpack.c.l.b16 %v474
  %v614 = vunpack.c.h.b16 %v474
  %v615 = vunpack.c.l.b16 %v475
  %v616 = vunpack.c.h.b16 %v475
  %v617 = vunpack.c.l.b16 %v476
  %v618 = vunpack.c.h.b16 %v476
  %v619 = vunpack.c.l.b16 %v477
  %v620 = vunpack.c.h.b16 %v477
  %v621 = vunpack.c.l.b16 %v478
  %v622 = vunpack.c.h.b16 %v478
  %v623 = vunpack.c.l.b16 %v479
  %v624 = vunpack.c.h.b16 %v479
  %v625 = vunpack.c.l.b16 %v480
  %v626 = vunpack.c.h.b16 %v480
  %v627 = vunpack.c.l.b16 %v481
  %v628 = vunpack.c.h.b16 %v481
  %v629 = vunpack.c.l.b16 %v482
  %v630 = vunpack.c.h.b16 %v482
  %v631 = vunpack.c.l.b16 %v483
  %v632 = vunpack.c.h.b16 %v483
  %v633 = vunpack.c.l.b16 %v484
  %v634 = vunpack.c.h.b16 %v484
  %v635 = vpack.c.b16 %v537, %v535
  %v636 = vpack.c.b16 %v538, %v536
  %v637 = vpack.c.b16 %v541, %v539
  %v638 = vpack.c.b16 %v542, %v540
  %v639 = vpack.c.b16 %v545, %v543
  %v640 = vpack.c.b16 %v546, %v544
  %v641 = vpack.c.b16 %v549, %v547
  %v642 = vpack.c.b16 %v550, %v548
  %v643 = vpack.c.b16 %v553, %v551
  %v644 = vpack.c.b16 %v554, %v552
  %v645 = vpack.c.b16 %v557, %v555
  %v646 = vpack.c.b16 %v558, %v556
  %v647 = vpack.c.b16 %v561, %v559
  %v648 = vpack.c.b16 %v562, %v560
  %v649 = vpack.c.b16 %v565, %v563
  %v650 = vpack.c.b16 %v566, %v564
  %v651 = vpack.c.b16 %v569, %v567
  %v652 = vpack.c.b16 %v570, %v568
  %v653 = vpack.c.b16 %v573, %v571
  %v654 = vpack.c.b16 %v574, %v572
  %v655 = vpack.c.b16 %v577, %v575
  %v656 = vpack.c.b16 %v578, %v576
  %v657 = vpack.c.b16 %v581, %v579
  %v658 = vpack.c.b16 %v582, %v580
  %v659 = vpack.c.b16 %v585, %v583
  %v660 = vpack.c.b16 %v586, %v584
  %v661 = vpack.c.b16 %v589, %v587
  %v662 = vpack.c.b16 %v590, %v588
  %v663 = vpack.c.b16 %v593, %v591
  %v664 = vpack.c.b16 %v594, %v592
  %v665 = vpack.c.b16 %v597, %v595
  %v666 = vpack.c.b16 %v598, %v596
  %v667 = vpack.c.b16 %v601, %v599
  %v668 = vpack.c.b16 %v602, %v600
  %v669 = vpack.c.b16 %v605, %v603
  %v670 = vpack.c.b16 %v606, %v604
  %v671 = vpack.c.b16 %v609, %v607
  %v672 = vpack.c.b16 %v610, %v608
  %v673 = vpack.c.b16 %v613, %v611
  %v674 = vpack.c.b16 %v614, %v612
  %v675 = vpack.c.b16 %v617, %v615
  %v676 = vpack.c.b16 %v618, %v616
  %v677 = vpack.c.b16 %v621, %v619
  %v678 = vpack.c.b16 %v622, %v620
  %v679 = vpack.c.b16 %v625, %v623
  %v680 = vpack.c.b16 %v626, %v624
  %v681 = vpack.c.b16 %v629, %v627
  %v682 = vpack.c.b16 %v630, %v628
  %v683 = vpack.c.b16 %v633, %v631
  %v684 = vpack.c.b16 %v634, %v632
  %735 = vmatprep.subr.bf16.mxu0 %v636
  %736 = vmatpush1.bf16.msra.mxu0 %v635
  %737 = vmatprep.subr.bf16.mxu0 %v638
  %738 = vmatpush1.bf16.msra.mxu0 %v637
  %739 = vmatprep.subr.bf16.mxu0 %v640
  %740 = vmatpush1.bf16.msra.mxu0 %v639
  %741 = vmatprep.subr.bf16.mxu0 %v642
  %742 = vmatpush1.bf16.msra.mxu0 %v641
  %743 = vmatprep.subr.bf16.mxu0 %v644
  %744 = vmatpush1.bf16.msra.mxu0 %v643
  %745 = vmatprep.subr.bf16.mxu0 %v646
  %746 = vmatpush1.bf16.msra.mxu0 %v645
  %747 = vmatprep.subr.bf16.mxu0 %v648
  %748 = vmatpush1.bf16.msra.mxu0 %v647
  %749 = vmatprep.subr.bf16.mxu0 %v650
  %750 = vmatpush1.bf16.msra.mxu0 %v649
  %751 = vmatprep.subr.bf16.mxu0 %v652
  %752 = vmatpush1.bf16.msra.mxu0 %v651
  %753 = vmatprep.subr.bf16.mxu0 %v654
  %754 = vmatpush1.bf16.msra.mxu0 %v653
  %755 = vmatprep.subr.bf16.mxu0 %v656
  %756 = vmatpush1.bf16.msra.mxu0 %v655
  %757 = vmatprep.subr.bf16.mxu0 %v658
  %758 = vmatpush1.bf16.msra.mxu0 %v657
  %759 = vmatprep.subr.bf16.mxu0 %v660
  %760 = vmatpush1.bf16.msra.mxu0 %v659
  %761 = vmatprep.subr.bf16.mxu0 %v662
  %762 = vmatpush1.bf16.msra.mxu0 %v661
  %763 = vmatprep.subr.bf16.mxu0 %v664
  %764 = vmatpush1.bf16.msra.mxu0 %v663
  %765 = vmatprep.subr.bf16.mxu0 %v666
  %766 = vmatpush1.bf16.msra.mxu0 %v665
  %767 = vmatprep.mubr.bf16.mxu0 %v85
  %768 = vmatmul.mubr.bf16.gmra.mrb[0].mxu0 %v84
  %v769 = vpop.f32.mrb[0].mxu0
  %v770 = vadd.f32 0.0, %v769
  %v771 = vpop.f32.mrb[0].mxu0
  %v772 = vadd.f32 0.0, %v771
  %v773 = vpop.f32.mrb[0].mxu0
  %v774 = vadd.f32 0.0, %v773
  %v775 = vpop.f32.mrb[0].mxu0
  %v776 = vadd.f32 0.0, %v775
  %777 = vdwg.mxu0
  %778 = vmatprep.subr.bf16.mxu0 %v668
  %779 = vmatpush1.bf16.msra.mxu0 %v667
  %780 = vmatprep.subr.bf16.mxu0 %v670
  %781 = vmatpush1.bf16.msra.mxu0 %v669
  %782 = vmatprep.subr.bf16.mxu0 %v672
  %783 = vmatpush1.bf16.msra.mxu0 %v671
  %784 = vmatprep.subr.bf16.mxu0 %v674
  %785 = vmatpush1.bf16.msra.mxu0 %v673
  %786 = vmatprep.subr.bf16.mxu0 %v676
  %787 = vmatpush1.bf16.msra.mxu0 %v675
  %788 = vmatprep.subr.bf16.mxu0 %v678
  %789 = vmatpush1.bf16.msra.mxu0 %v677
  %790 = vmatprep.subr.bf16.mxu0 %v680
  %791 = vmatpush1.bf16.msra.mxu0 %v679
  %792 = vmatprep.subr.bf16.mxu0 %v682
  %793 = vmatpush1.bf16.msra.mxu0 %v681
  %794 = vmatprep.subr.bf16.mxu0 %v684
  %795 = vmatpush1.bf16.msra.mxu0 %v683
  %796 = vmatprep.subr.bf16.mxu0 0
  %797 = vmatpush1.bf16.msra.mxu0 0
  %798 = vmatprep.subr.bf16.mxu0 0
  %799 = vmatpush1.bf16.msra.mxu0 0
  %800 = vmatprep.subr.bf16.mxu0 0
  %801 = vmatpush1.bf16.msra.mxu0 0
  %802 = vmatprep.subr.bf16.mxu0 0
  %803 = vmatpush1.bf16.msra.mxu0 0
  %804 = vmatprep.subr.bf16.mxu0 0
  %805 = vmatpush1.bf16.msra.mxu0 0
  %806 = vmatprep.subr.bf16.mxu0 0
  %807 = vmatpush1.bf16.msra.mxu0 0
  %808 = vmatprep.subr.bf16.mxu0 0
  %809 = vmatpush1.bf16.msra.mxu0 0
  %810 = vmatprep.mubr.bf16.mxu0 %v343
  %811 = vmatmul.mubr.bf16.gmra.mrb[0].mxu0 %v86
  %v812 = vpop.f32.mrb[0].mxu0
  %v813 = vadd.f32 %v770, %v812
  %v814 = vpop.f32.mrb[0].mxu0
  %v815 = vadd.f32 %v772, %v814
  %v816 = vpop.f32.mrb[0].mxu0
  %v817 = vadd.f32 %v774, %v816
  %v818 = vpop.f32.mrb[0].mxu0
  %v819 = vadd.f32 %v776, %v818
  %820 = vdwg.mxu0
  %v821 = vmul.f32 %v813, %v813
  %v822 = vmul.f32 %v815, %v815
  %v823 = vmul.f32 %v817, %v817
  %v824 = vmul.f32 %v819, %v819
  %v825 = vadd.f32 %v431, %v821
  %v826 = vadd.f32 %v432, %v822
  %v827 = vadd.f32 %v433, %v823
  %v828 = vadd.f32 %v434, %v824
  %v829 = vld [vmem:[%s2] sm:$0xff]
  %v830 = vld [vmem:[%s2 + $0x8] sm:$0xff]
  %v831 = vld [vmem:[%s2 + $0x10] sm:$0xff]
  %v832 = vld [vmem:[%s2 + $0x18] sm:$0xff]
  %v833 = vld [vmem:[%s2 + $0x20] sm:$0xff]
  %v834 = vld [vmem:[%s2 + $0x28] sm:$0xff]
  %v835 = vld [vmem:[%s2 + $0x30] sm:$0xff]
  %v836 = vld [vmem:[%s2 + $0x38] sm:$0xff]
  %v837 = vld [vmem:[%s2 + $0x40] sm:$0xff]
  %v838 = vld [vmem:[%s2 + $0x48] sm:$0xff]
  %v839 = vld [vmem:[%s2 + $0x50] sm:$0xff]
  %v840 = vld [vmem:[%s2 + $0x58] sm:$0xff]
  %v841 = vld [vmem:[%s2 + $0x60] sm:$0xff]
  %v842 = vld [vmem:[%s2 + $0x68] sm:$0xff]
  %v843 = vld [vmem:[%s2 + $0x70] sm:$0xff]
  %v844 = vld [vmem:[%s2 + $0x78] sm:$0xff]
  %v845 = vld [vmem:[%s2 + $0x80] sm:$0xff]
  %v846 = vld [vmem:[%s2 + $0x88] sm:$0xff]
  %v847 = vld [vmem:[%s2 + $0x90] sm:$0xff]
  %v848 = vld [vmem:[%s2 + $0x98] sm:$0xff]
  %v849 = vld [vmem:[%s2 + $0xa0] sm:$0xff]
  %v850 = vld [vmem:[%s2 + $0xa8] sm:$0xff]
  %v851 = vld [vmem:[%s2 + $0xb0] sm:$0xff]
  %v852 = vld [vmem:[%s2 + $0xb8] sm:$0xff]
  %v853 = vld [vmem:[%s2 + $0xc0] sm:$0xff]
  %v854 = vld [vmem:[%s2 + $0xc8] sm:$0xff]
  %v855 = vld [vmem:[%s2 + $0xd0] sm:$0xff]
  %v856 = vld [vmem:[%s2 + $0xd8] sm:$0xff]
  %v857 = vld [vmem:[%s2 + $0xe0] sm:$0xff]
  %v858 = vld [vmem:[%s2 + $0xe8] sm:$0xff]
  %v859 = vld [vmem:[%s2 + $0xf0] sm:$0xff]
  %v860 = vld [vmem:[%s2 + $0xf8] sm:$0xff]
  %861 = vmatprep.subr.mxu0 0.0
  %862 = vmatpush1.msra.mxu0 %v829
  %863 = vmatprep.subr.mxu0 0.0
  %864 = vmatpush1.msra.mxu0 %v830
  %865 = vmatprep.subr.mxu0 0.0
  %866 = vmatpush1.msra.mxu0 %v831
  %867 = vmatprep.subr.mxu0 0.0
  %868 = vmatpush1.msra.mxu0 %v832
  %869 = vmatprep.subr.mxu0 0.0
  %870 = vmatpush1.msra.mxu0 %v833
  %871 = vmatprep.subr.mxu0 0.0
  %872 = vmatpush1.msra.mxu0 %v834
  %873 = vmatprep.subr.mxu0 0.0
  %874 = vmatpush1.msra.mxu0 %v835
  %875 = vmatprep.subr.mxu0 0.0
  %876 = vmatpush1.msra.mxu0 %v836
  %877 = vmatprep.subr.mxu0 0.0
  %878 = vmatpush1.msra.mxu0 %v837
  %879 = vmatprep.subr.mxu0 0.0
  %880 = vmatpush1.msra.mxu0 %v838
  %881 = vmatprep.subr.mxu0 0.0
  %882 = vmatpush1.msra.mxu0 %v839
  %883 = vmatprep.subr.mxu0 0.0
  %884 = vmatpush1.msra.mxu0 %v840
  %885 = vmatprep.subr.mxu0 0.0
  %886 = vmatpush1.msra.mxu0 %v841
  %887 = vmatprep.subr.mxu0 0.0
  %888 = vmatpush1.msra.mxu0 %v842
  %889 = vmatprep.subr.mxu0 0.0
  %890 = vmatpush1.msra.mxu0 %v843
  %891 = vmatprep.subr.mxu0 0.0
  %892 = vmatpush1.msra.mxu0 %v844
  %893 = vmatprep.subr.mxu0 0.0
  %894 = vmatpush1.msra.mxu0 %v845
  %895 = vmatprep.subr.mxu0 0.0
  %896 = vmatpush1.msra.mxu0 %v846
  %897 = vmatprep.subr.mxu0 0.0
  %898 = vmatpush1.msra.mxu0 %v847
  %899 = vmatprep.subr.mxu0 0.0
  %900 = vmatpush1.msra.mxu0 %v848
  %901 = vmatprep.subr.mxu0 0.0
  %902 = vmatpush1.msra.mxu0 %v849
  %903 = vmatprep.subr.mxu0 0.0
  %904 = vmatpush1.msra.mxu0 %v850
  %905 = vmatprep.subr.mxu0 0.0
  %906 = vmatpush1.msra.mxu0 %v851
  %907 = vmatprep.subr.mxu0 0.0
  %908 = vmatpush1.msra.mxu0 %v852
  %909 = vmatprep.subr.mxu0 0.0
  %910 = vmatpush1.msra.mxu0 %v853
  %911 = vmatprep.subr.mxu0 0.0
  %912 = vmatpush1.msra.mxu0 %v854
  %913 = vmatprep.subr.mxu0 0.0
  %914 = vmatpush1.msra.mxu0 %v855
  %915 = vmatprep.subr.mxu0 0.0
  %916 = vmatpush1.msra.mxu0 %v856
  %917 = vmatprep.subr.mxu0 0.0
  %918 = vmatpush1.msra.mxu0 %v857
  %919 = vmatprep.subr.mxu0 0.0
  %920 = vmatpush1.msra.mxu0 %v858
  %921 = vmatprep.subr.mxu0 0.0
  %922 = vmatpush1.msra.mxu0 %v859
  %923 = vmatprep.subr.mxu0 0.0
  %924 = vmatpush1.msra.mxu0 %v860
  %925 = vmatprep.mubr.f32.mxu0 %v826
  %926 = vmatmul.mubr.f32.gmra.mrb[0].mxu0 %v825
  %v927 = vpop.f32.mrb[0].mxu0
  %v928 = vadd.f32 0.0, %v927
  %v929 = vpop.f32.mrb[0].mxu0
  %930 = vmatprep.mubr.f32.mxu0 %v828
  %931 = vmatmul.mubr.f32.gmra.mrb[0].mxu0 %v827
  %v932 = vpop.f32.mrb[0].mxu0
  %v933 = vadd.f32 0.0, %v932
  %v934 = vpop.f32.mrb[0].mxu0
  %935 = vdwg.mxu0
  %v936 = vmax.f32 %v928, 2.220446e-16
  %v937 = vmax.f32 %v933, 2.220446e-16
  %v938 = vlog2.pop %v936
  %v939 = vmul.f32 %v938, 0.6931472
  %v940 = vlog2.pop %v937
  %v941 = vmul.f32 %v940, 0.6931472
  %v942 = vld [vmem:[%s3] sm:$0xff]
  %v943 = vld [vmem:[%s3 + $0x8] sm:$0xff]
  %v944 = vld [vmem:[%s3 + $0x10] sm:$0xff]
  %v945 = vld [vmem:[%s3 + $0x18] sm:$0xff]
  %v946 = vld [vmem:[%s3 + $0x20] sm:$0xff]
  %v947 = vld [vmem:[%s3 + $0x28] sm:$0xff]
  %v948 = vld [vmem:[%s3 + $0x30] sm:$0xff]
  %v949 = vld [vmem:[%s3 + $0x38] sm:$0xff]
  %v950 = vld [vmem:[%s3 + $0x40] sm:$0xff]
  %v951 = vld [vmem:[%s3 + $0x48] sm:$0xff]
  %v952 = vld [vmem:[%s3 + $0x50] sm:$0xff]
  %v953 = vld [vmem:[%s3 + $0x58] sm:$0xff]
  %v954 = vld [vmem:[%s3 + $0x60] sm:$0xff]
  %v955 = vld [vmem:[%s3 + $0x68] sm:$0xff]
  %v956 = vld [vmem:[%s3 + $0x70] sm:$0xff]
  %v957 = vld [vmem:[%s3 + $0x78] sm:$0xff]
  %958 = vmatprep.subr.mxu0 0.0
  %959 = vmatpush1.msra.mxu0 %v942
  %960 = vmatprep.subr.mxu0 0.0
  %961 = vmatpush1.msra.mxu0 %v943
  %962 = vmatprep.subr.mxu0 0.0
  %963 = vmatpush1.msra.mxu0 %v944
  %964 = vmatprep.subr.mxu0 0.0
  %965 = vmatpush1.msra.mxu0 %v945
  %966 = vmatprep.subr.mxu0 0.0
  %967 = vmatpush1.msra.mxu0 %v946
  %968 = vmatprep.subr.mxu0 0.0
  %969 = vmatpush1.msra.mxu0 %v947
  %970 = vmatprep.subr.mxu0 0.0
  %971 = vmatpush1.msra.mxu0 %v948
  %972 = vmatprep.subr.mxu0 0.0
  %973 = vmatpush1.msra.mxu0 %v949
  %974 = vmatprep.subr.mxu0 0.0
  %975 = vmatpush1.msra.mxu0 %v950
  %976 = vmatprep.subr.mxu0 0.0
  %977 = vmatpush1.msra.mxu0 %v951
  %978 = vmatprep.subr.mxu0 0.0
  %979 = vmatpush1.msra.mxu0 %v952
  %980 = vmatprep.subr.mxu0 0.0
  %981 = vmatpush1.msra.mxu0 %v953
  %982 = vmatprep.subr.mxu0 0.0
  %983 = vmatpush1.msra.mxu0 %v954
  %984 = vmatprep.subr.mxu0 0.0
  %985 = vmatpush1.msra.mxu0 %v955
  %986 = vmatprep.subr.mxu0 0.0
  %987 = vmatpush1.msra.mxu0 %v956
  %988 = vmatprep.subr.mxu0 0.0
  %989 = vmatpush1.msra.mxu0 %v957
  %990 = vmatprep.subr.mxu0 0.0
  %991 = vmatpush1.msra.mxu0 0.0
  %992 = vmatprep.subr.mxu0 0.0
  %993 = vmatpush1.msra.mxu0 0.0
  %994 = vmatprep.subr.mxu0 0.0
  %995 = vmatpush1.msra.mxu0 0.0
  %996 = vmatprep.subr.mxu0 0.0
  %997 = vmatpush1.msra.mxu0 0.0
  %998 = vmatprep.subr.mxu0 0.0
  %999 = vmatpush1.msra.mxu0 0.0
  %1000 = vmatprep.subr.mxu0 0.0
  %1001 = vmatpush1.msra.mxu0 0.0
  %1002 = vmatprep.subr.mxu0 0.0
  %1003 = vmatpush1.msra.mxu0 0.0
  %1004 = vmatprep.subr.mxu0 0.0
  %1005 = vmatpush1.msra.mxu0 0.0
  %1006 = vmatprep.subr.mxu0 0.0
  %1007 = vmatpush1.msra.mxu0 0.0
  %1008 = vmatprep.subr.mxu0 0.0
  %1009 = vmatpush1.msra.mxu0 0.0
  %1010 = vmatprep.subr.mxu0 0.0
  %1011 = vmatpush1.msra.mxu0 0.0
  %1012 = vmatprep.subr.mxu0 0.0
  %1013 = vmatpush1.msra.mxu0 0.0
  %1014 = vmatprep.subr.mxu0 0.0
  %1015 = vmatpush1.msra.mxu0 0.0
  %1016 = vmatprep.subr.mxu0 0.0
  %1017 = vmatpush1.msra.mxu0 0.0
  %1018 = vmatprep.subr.mxu0 0.0
  %1019 = vmatpush1.msra.mxu0 0.0
  %1020 = vmatprep.subr.mxu0 0.0
  %1021 = vmatpush1.msra.mxu0 0.0
  %1022 = vmatprep.mubr.f32.mxu0 0.0
  %1023 = vmatmul.mubr.f32.gmra.mrb[0].mxu0 %v939
  %v1024 = vpop.f32.mrb[0].mxu0
  %v1025 = vadd.f32 0.0, %v1024
  %v1026 = vpop.f32.mrb[0].mxu0
  %1027 = vmatprep.mubr.f32.mxu0 0.0
  %1028 = vmatmul.mubr.f32.gmra.mrb[0].mxu0 %v941
  %v1029 = vpop.f32.mrb[0].mxu0
  %v1030 = vadd.f32 0.0, %v1029
  %v1031 = vpop.f32.mrb[0].mxu0
  %1032 = vdwg.mxu0
  %1033 = vst [vmem:[%s4] sm:$0xff] %v1025
  %1034 = vst [vmem:[%s4 + $0x8] sm:$0xff] %v1030
  // Predicated region
  $region18: #{_forward_impl.1} parent=0 // pred_check
    _
  $region19: #{_forward_impl.1} parent=0 // pred_check_branch
    %1036 = sbr.rel (0) target = $region21
  $region20: #{_forward_impl.1} parent=0 // pred_region
    _
  $region21: #{_forward_impl.1} parent=0 // pred_fallthru
    _
  // Predicated region
  $region22: #{_forward_impl.1} parent=0 // pred_check
    _
  $region23: #{_forward_impl.1} parent=0 // pred_check_branch
    %1038 = sbr.rel (0) target = $region25
  $region24: #{_forward_impl.1} parent=0 // pred_region
    _
  $region25: #{_forward_impl.1} parent=0 // pred_fallthru
    _

</llo_original>
